<compile_context>
chip_gen: v7x
topology: tpu7x:2x2x1
jax: 0.10.0
libtpu: 0.0.40
codegen_flags: <defaults>
</compile_context>

<pallas_src>
import functools

import jax
import jax.numpy as jnp
import numpy as np
from jax import lax
from jax.experimental import pallas as pl
from jax.experimental.pallas import tpu as pltpu


NUM_AGENTS = 4          # cfg.num_agents
NUM_HIDDEN = 32         # cfg.num_hidden_nodes
BATCH = 2
EPS = 1e-8              # matches F.normalize(..., eps=1e-08)
LEAKY_SLOPE = 0.01      # nn.LeakyReLU default

LANES = 128                     # lane-dense padded feature width
BATCH_TILE = 8                  # sublane-exact batch tile (one vreg of rows)
ROW_STRIDE = 2 * NUM_AGENTS     # spread layout: entry (i, j) lives at lane ROW_STRIDE*i + j


def _leaky_relu(z):
    return jnp.where(z > 0, z, LEAKY_SLOPE * z)


def _softplus(z):
    # numerically stable softplus: max(z,0) + log1p(exp(-|z|))
    return jnp.maximum(z, 0.0) + jnp.log1p(jnp.exp(-jnp.abs(z)))


def _both_ways(r, shift):
    """r[k+shift] + r[k-shift] at lane k, independent of roll sign convention.

    shift and LANES-shift are the two cyclic directions of a 128-lane rotate,
    so summing both is symmetric no matter which way pltpu.roll rotates.
    """
    return pltpu.roll(r, shift, axis=1) + pltpu.roll(r, LANES - shift, axis=1)


def primal_kernel(x_ref, w_ref, b_ref, out_ref, *, num_agents, num_layers):
    """One (BATCH_TILE, 128) batch tile; weights/biases resident across tiles.

    x_ref : (BT, 128) f32          zero-padded activations
    w_ref : (L+1, 128, 128) bf16   zero-padded weights (in, out); last layer spread
    b_ref : (L+1, 1, 128) f32      zero-padded biases; last layer spread
    out   : (BT, 128) f32          spread-layout doubly-normalized output
    """
    A = num_agents
    h = x_ref[...]                                               # f32

    # input_block: L x (Linear -> LeakyReLU). bf16 MXU operands, f32 accumulate
    # and f32 elementwise (v5e-safe).
    for i in range(num_layers):
        z = jnp.dot(h.astype(jnp.bfloat16), w_ref[i],
                    preferred_element_type=jnp.float32) + b_ref[i]
        h = _leaky_relu(z)

    # layer_out (spread column layout) + softplus
    z = jnp.dot(h.astype(jnp.bfloat16), w_ref[num_layers],
                preferred_element_type=jnp.float32) + b_ref[num_layers]
    r = _softplus(z)

    # Zero the padded lanes: softplus(0) = ln 2 would contaminate the sums.
    lane = lax.broadcasted_iota(jnp.int32, r.shape, 1)
    valid = (lane < ROW_STRIDE * A) & ((lane % ROW_STRIDE) < A)
    r = jnp.where(valid, r, 0.0)

    # F.normalize(r, p=1, dim=1): column sums (same j) — members ROW_STRIDE apart.
    # Zero-padded lanes make the symmetric roll-sum exact (no masks, no MXU).
    col_den = r
    for d in range(1, A):
        col_den = col_den + _both_ways(r, d * ROW_STRIDE)
    r = r * pl.reciprocal(jnp.maximum(col_den, EPS), approx=False)

    # F.normalize(r, p=1, dim=2): row sums (same i) — members at adjacent lanes.
    row_den = r
    for d in range(1, A):
        row_den = row_den + _both_ways(r, d)
    r = r * pl.reciprocal(jnp.maximum(row_den, EPS), approx=False)

    out_ref[...] = r


def init_params(key, num_agents=NUM_AGENTS, num_hidden=NUM_HIDDEN):
    """Deterministic synthetic parameters (same shapes as the PyTorch module)."""
    in_dim = 2 * num_agents * num_agents
    out_dim = num_agents * num_agents
    dims = [(in_dim, num_hidden)] + [(num_hidden, num_hidden)] * 4 + [(num_hidden, out_dim)]
    params = []
    for fan_in, fan_out in dims:
        key, kw, kb = jax.random.split(key, 3)
        scale = 1.0 / np.sqrt(fan_in)
        w = jax.random.uniform(kw, (fan_in, fan_out), jnp.float32, -scale, scale)
        b = jax.random.uniform(kb, (fan_out,), jnp.float32, -scale, scale)
        params.append((w, b))
    return params


def pack_params(params, num_agents=NUM_AGENTS):
    """Pack all layers into two lane-dense buffers.

    Weights -> (L+1, 128, 128) bf16 (MXU operands), biases -> (L+1, 1, 128) f32.
    The output layer's columns are scattered into the spread layout
    (entry (i, j) -> lane ROW_STRIDE*i + j) so both normalizations become
    mask-free roll-and-add reductions inside the kernel.
    """
    A = num_agents
    n = len(params)
    assert max(w.shape[0] for w, _ in params) <= LANES
    assert max(w.shape[1] for w, _ in params) <= LANES
    # spread layout must fit 128 lanes incl. the negative-roll wrap zone
    assert ROW_STRIDE * (A - 1) + A + ROW_STRIDE * (A - 1) <= LANES

    w_all = np.zeros((n, LANES, LANES), np.float32)
    b_all = np.zeros((n, 1, LANES), np.float32)

    for l, (w, b) in enumerate(params[:-1]):                    # hidden layers: dense pack
        w_np, b_np = np.asarray(w), np.asarray(b)
        w_all[l, : w_np.shape[0], : w_np.shape[1]] = w_np
        b_all[l, 0, : b_np.shape[0]] = b_np

    w_out, b_out = (np.asarray(t) for t in params[-1])          # output layer: spread pack
    for k in range(A * A):
        lane_idx = ROW_STRIDE * (k // A) + (k % A)
        w_all[-1, : w_out.shape[0], lane_idx] = w_out[:, k]
        b_all[-1, 0, lane_idx] = b_out[k]

    return jnp.asarray(w_all, jnp.bfloat16), jnp.asarray(b_all, jnp.float32)


def primal_net_forward(p, q, w_all, b_all, num_agents=NUM_AGENTS):
    A = num_agents
    B = p.shape[0]
    in_dim = 2 * A * A
    num_layers = w_all.shape[0] - 1

    # torch.stack([p, q], axis=-1).view(-1, 2*A*A): p/q interleaved per element
    x = jnp.stack([p, q], axis=-1).reshape(B, in_dim).astype(jnp.float32)

    # pad to lane-dense (128) features and a sublane-exact batch tile
    pad_rows = (-B) % BATCH_TILE
    x = jnp.pad(x, ((0, pad_rows), (0, LANES - in_dim)))
    b_padded = B + pad_rows
    grid = (b_padded // BATCH_TILE,)

    kernel = functools.partial(primal_kernel, num_agents=A, num_layers=num_layers)

    out = pl.pallas_call(
        kernel,
        out_shape=jax.ShapeDtypeStruct((b_padded, LANES), jnp.float32),
        grid_spec=pltpu.PrefetchScalarGridSpec(
            num_scalar_prefetch=0,
            grid=grid,
            in_specs=[
                pl.BlockSpec((BATCH_TILE, LANES), lambda b: (b, 0)),   # batch-tiled activations
                pl.BlockSpec(w_all.shape, lambda b: (0, 0, 0)),        # resident weights
                pl.BlockSpec(b_all.shape, lambda b: (0, 0, 0)),        # resident biases
            ],
            out_specs=pl.BlockSpec((BATCH_TILE, LANES), lambda b: (b, 0)),
        ),
        compiler_params=pltpu.CompilerParams(
            dimension_semantics=("parallel",),      # batch tiles shard across v7x's 2 TCs
            vmem_limit_bytes=32 * 1024 * 1024,      # explicit, safe on v5e/v6e/v7x
        ),
    )(x, w_all, b_all)

    # undo spread layout (lane ROW_STRIDE*i + j -> (i, j)) and drop padding
    r = out[:B, : ROW_STRIDE * A].reshape(B, A, ROW_STRIDE)[:, :, :A]
    return r


def _ref_forward(p, q, params, num_agents=NUM_AGENTS):
    """Pure-JAX reference of the PyTorch module's forward (f32)."""
    A = num_agents
    B = p.shape[0]
    h = jnp.stack([p, q], axis=-1).reshape(B, 2 * A * A).astype(jnp.float32)
    for w, b in params[:-1]:
        z = h @ w + b
        h = jnp.where(z > 0, z, LEAKY_SLOPE * z)
    w, b = params[-1]
    r = (h @ w + b).reshape(B, A, A)
    r = jax.nn.softplus(r)
    r = r / jnp.maximum(r.sum(axis=1, keepdims=True), EPS)   # F.normalize dim=1
    r = r / jnp.maximum(r.sum(axis=2, keepdims=True), EPS)   # F.normalize dim=2
    return r


if __name__ == "__main__":
    key = jax.random.PRNGKey(0)
    key, kp, kq, kparam = jax.random.split(key, 4)

    p = jax.random.normal(kp, (BATCH, NUM_AGENTS, NUM_AGENTS), jnp.float32)
    q = jax.random.normal(kq, (BATCH, NUM_AGENTS, NUM_AGENTS), jnp.float32)
    params = init_params(kparam)
    w_all, b_all = pack_params(params)

    r = primal_net_forward(p, q, w_all, b_all)
    r = jax.block_until_ready(r)
    r_np = np.asarray(r)

    r_ref = np.asarray(_ref_forward(p, q, params))

    assert r_np.shape == (BATCH, NUM_AGENTS, NUM_AGENTS)
    assert np.all(np.isfinite(r_np))
    # the final F.normalize(dim=2) makes every row sum to 1 (exact reciprocals)
    assert np.allclose(r_np.sum(axis=2), 1.0, atol=1e-4)
    # bf16 MXU operands accumulate small rounding across the 6-layer chain
    assert np.allclose(r_np, r_ref, rtol=2e-2, atol=1e-3)
    print("KERNEL_OK")
</pallas_src>

<mosaic_0001>
module attributes {stable_mosaic.version = 11 : i64} {
  func.func @primal_kernel(%arg0: i32, %arg1: memref<8x128xf32, #tpu.memory_space<vmem>>, %arg2: memref<6x128x128xbf16, #tpu.memory_space<vmem>>, %arg3: memref<6x1x128xf32, #tpu.memory_space<vmem>>, %arg4: memref<8x128xf32, #tpu.memory_space<vmem>>) attributes {dimension_semantics = [#tpu.dimension_semantics<parallel>], iteration_bounds = array<i64: 1>, scalar_prefetch = 0 : i64, scratch_operands = 0 : i64, tpu.core_type = #tpu.core_type<tc>, window_params = [{transform_indices = @transform_0, window_bounds = array<i64: 8, 128>}, {pipeline_mode = #tpu.pipeline_mode<synchronous>, transform_indices = @transform_1, window_bounds = array<i64: 6, 128, 128>}, {pipeline_mode = #tpu.pipeline_mode<synchronous>, transform_indices = @transform_2, window_bounds = array<i64: 6, 1, 128>}, {transform_indices = @transform_3, window_bounds = array<i64: 8, 128>}]} {
    %c0 = arith.constant 0 : index
    %c0_0 = arith.constant 0 : index
    %0 = vector.load %arg1[%c0, %c0_0] : memref<8x128xf32, #tpu.memory_space<vmem>>, vector<8x128xf32>
    %1 = arith.truncf %0 : vector<8x128xf32> to vector<8x128xbf16>
    %c0_1 = arith.constant 0 : index
    %c0_2 = arith.constant 0 : index
    %c0_3 = arith.constant 0 : index
    %2 = vector.load %arg2[%c0_1, %c0_2, %c0_3] : memref<6x128x128xbf16, #tpu.memory_space<vmem>>, vector<1x128x128xbf16>
    %3 = vector.shape_cast %2 : vector<1x128x128xbf16> to vector<128x128xbf16>
    %cst = arith.constant dense<0.000000e+00> : vector<8x128xf32>
    %4 = tpu.matmul %1, %3, %cst {dimension_numbers = #tpu.dot_dimension_numbers<[1], [0], [0], [1], [0, 0, 1, 1], [], []>} : vector<8x128xbf16>, vector<128x128xbf16>, vector<8x128xf32> -> vector<8x128xf32>
    %c0_4 = arith.constant 0 : index
    %c0_5 = arith.constant 0 : index
    %c0_6 = arith.constant 0 : index
    %5 = vector.load %arg3[%c0_4, %c0_5, %c0_6] : memref<6x1x128xf32, #tpu.memory_space<vmem>>, vector<1x1x128xf32>
    %6 = vector.shape_cast %5 : vector<1x1x128xf32> to vector<1x128xf32>
    %7 = vector.broadcast %6 : vector<1x128xf32> to vector<8x128xf32>
    %8 = arith.addf %4, %7 : vector<8x128xf32>
    %cst_7 = arith.constant 0.000000e+00 : f32
    %9 = vector.broadcast %cst_7 : f32 to vector<8x128xf32>
    %10 = arith.cmpf ogt, %8, %9 : vector<8x128xf32>
    %cst_8 = arith.constant 0.00999999977 : f32
    %11 = vector.broadcast %cst_8 : f32 to vector<8x128xf32>
    %12 = arith.mulf %11, %8 : vector<8x128xf32>
    %13 = arith.select %10, %8, %12 : vector<8x128xi1>, vector<8x128xf32>
    %14 = arith.truncf %13 : vector<8x128xf32> to vector<8x128xbf16>
    %c1 = arith.constant 1 : index
    %c0_9 = arith.constant 0 : index
    %c0_10 = arith.constant 0 : index
    %15 = vector.load %arg2[%c1, %c0_9, %c0_10] : memref<6x128x128xbf16, #tpu.memory_space<vmem>>, vector<1x128x128xbf16>
    %16 = vector.shape_cast %15 : vector<1x128x128xbf16> to vector<128x128xbf16>
    %cst_11 = arith.constant dense<0.000000e+00> : vector<8x128xf32>
    %17 = tpu.matmul %14, %16, %cst_11 {dimension_numbers = #tpu.dot_dimension_numbers<[1], [0], [0], [1], [0, 0, 1, 1], [], []>} : vector<8x128xbf16>, vector<128x128xbf16>, vector<8x128xf32> -> vector<8x128xf32>
    %c1_12 = arith.constant 1 : index
    %c0_13 = arith.constant 0 : index
    %c0_14 = arith.constant 0 : index
    %18 = vector.load %arg3[%c1_12, %c0_13, %c0_14] : memref<6x1x128xf32, #tpu.memory_space<vmem>>, vector<1x1x128xf32>
    %19 = vector.shape_cast %18 : vector<1x1x128xf32> to vector<1x128xf32>
    %20 = vector.broadcast %19 : vector<1x128xf32> to vector<8x128xf32>
    %21 = arith.addf %17, %20 : vector<8x128xf32>
    %cst_15 = arith.constant 0.000000e+00 : f32
    %22 = vector.broadcast %cst_15 : f32 to vector<8x128xf32>
    %23 = arith.cmpf ogt, %21, %22 : vector<8x128xf32>
    %cst_16 = arith.constant 0.00999999977 : f32
    %24 = vector.broadcast %cst_16 : f32 to vector<8x128xf32>
    %25 = arith.mulf %24, %21 : vector<8x128xf32>
    %26 = arith.select %23, %21, %25 : vector<8x128xi1>, vector<8x128xf32>
    %27 = arith.truncf %26 : vector<8x128xf32> to vector<8x128xbf16>
    %c2 = arith.constant 2 : index
    %c0_17 = arith.constant 0 : index
    %c0_18 = arith.constant 0 : index
    %28 = vector.load %arg2[%c2, %c0_17, %c0_18] : memref<6x128x128xbf16, #tpu.memory_space<vmem>>, vector<1x128x128xbf16>
    %29 = vector.shape_cast %28 : vector<1x128x128xbf16> to vector<128x128xbf16>
    %cst_19 = arith.constant dense<0.000000e+00> : vector<8x128xf32>
    %30 = tpu.matmul %27, %29, %cst_19 {dimension_numbers = #tpu.dot_dimension_numbers<[1], [0], [0], [1], [0, 0, 1, 1], [], []>} : vector<8x128xbf16>, vector<128x128xbf16>, vector<8x128xf32> -> vector<8x128xf32>
    %c2_20 = arith.constant 2 : index
    %c0_21 = arith.constant 0 : index
    %c0_22 = arith.constant 0 : index
    %31 = vector.load %arg3[%c2_20, %c0_21, %c0_22] : memref<6x1x128xf32, #tpu.memory_space<vmem>>, vector<1x1x128xf32>
    %32 = vector.shape_cast %31 : vector<1x1x128xf32> to vector<1x128xf32>
    %33 = vector.broadcast %32 : vector<1x128xf32> to vector<8x128xf32>
    %34 = arith.addf %30, %33 : vector<8x128xf32>
    %cst_23 = arith.constant 0.000000e+00 : f32
    %35 = vector.broadcast %cst_23 : f32 to vector<8x128xf32>
    %36 = arith.cmpf ogt, %34, %35 : vector<8x128xf32>
    %cst_24 = arith.constant 0.00999999977 : f32
    %37 = vector.broadcast %cst_24 : f32 to vector<8x128xf32>
    %38 = arith.mulf %37, %34 : vector<8x128xf32>
    %39 = arith.select %36, %34, %38 : vector<8x128xi1>, vector<8x128xf32>
    %40 = arith.truncf %39 : vector<8x128xf32> to vector<8x128xbf16>
    %c3 = arith.constant 3 : index
    %c0_25 = arith.constant 0 : index
    %c0_26 = arith.constant 0 : index
    %41 = vector.load %arg2[%c3, %c0_25, %c0_26] : memref<6x128x128xbf16, #tpu.memory_space<vmem>>, vector<1x128x128xbf16>
    %42 = vector.shape_cast %41 : vector<1x128x128xbf16> to vector<128x128xbf16>
    %cst_27 = arith.constant dense<0.000000e+00> : vector<8x128xf32>
    %43 = tpu.matmul %40, %42, %cst_27 {dimension_numbers = #tpu.dot_dimension_numbers<[1], [0], [0], [1], [0, 0, 1, 1], [], []>} : vector<8x128xbf16>, vector<128x128xbf16>, vector<8x128xf32> -> vector<8x128xf32>
    %c3_28 = arith.constant 3 : index
    %c0_29 = arith.constant 0 : index
    %c0_30 = arith.constant 0 : index
    %44 = vector.load %arg3[%c3_28, %c0_29, %c0_30] : memref<6x1x128xf32, #tpu.memory_space<vmem>>, vector<1x1x128xf32>
    %45 = vector.shape_cast %44 : vector<1x1x128xf32> to vector<1x128xf32>
    %46 = vector.broadcast %45 : vector<1x128xf32> to vector<8x128xf32>
    %47 = arith.addf %43, %46 : vector<8x128xf32>
    %cst_31 = arith.constant 0.000000e+00 : f32
    %48 = vector.broadcast %cst_31 : f32 to vector<8x128xf32>
    %49 = arith.cmpf ogt, %47, %48 : vector<8x128xf32>
    %cst_32 = arith.constant 0.00999999977 : f32
    %50 = vector.broadcast %cst_32 : f32 to vector<8x128xf32>
    %51 = arith.mulf %50, %47 : vector<8x128xf32>
    %52 = arith.select %49, %47, %51 : vector<8x128xi1>, vector<8x128xf32>
    %53 = arith.truncf %52 : vector<8x128xf32> to vector<8x128xbf16>
    %c4 = arith.constant 4 : index
    %c0_33 = arith.constant 0 : index
    %c0_34 = arith.constant 0 : index
    %54 = vector.load %arg2[%c4, %c0_33, %c0_34] : memref<6x128x128xbf16, #tpu.memory_space<vmem>>, vector<1x128x128xbf16>
    %55 = vector.shape_cast %54 : vector<1x128x128xbf16> to vector<128x128xbf16>
    %cst_35 = arith.constant dense<0.000000e+00> : vector<8x128xf32>
    %56 = tpu.matmul %53, %55, %cst_35 {dimension_numbers = #tpu.dot_dimension_numbers<[1], [0], [0], [1], [0, 0, 1, 1], [], []>} : vector<8x128xbf16>, vector<128x128xbf16>, vector<8x128xf32> -> vector<8x128xf32>
    %c4_36 = arith.constant 4 : index
    %c0_37 = arith.constant 0 : index
    %c0_38 = arith.constant 0 : index
    %57 = vector.load %arg3[%c4_36, %c0_37, %c0_38] : memref<6x1x128xf32, #tpu.memory_space<vmem>>, vector<1x1x128xf32>
    %58 = vector.shape_cast %57 : vector<1x1x128xf32> to vector<1x128xf32>
    %59 = vector.broadcast %58 : vector<1x128xf32> to vector<8x128xf32>
    %60 = arith.addf %56, %59 : vector<8x128xf32>
    %cst_39 = arith.constant 0.000000e+00 : f32
    %61 = vector.broadcast %cst_39 : f32 to vector<8x128xf32>
    %62 = arith.cmpf ogt, %60, %61 : vector<8x128xf32>
    %cst_40 = arith.constant 0.00999999977 : f32
    %63 = vector.broadcast %cst_40 : f32 to vector<8x128xf32>
    %64 = arith.mulf %63, %60 : vector<8x128xf32>
    %65 = arith.select %62, %60, %64 : vector<8x128xi1>, vector<8x128xf32>
    %66 = arith.truncf %65 : vector<8x128xf32> to vector<8x128xbf16>
    %c5 = arith.constant 5 : index
    %c0_41 = arith.constant 0 : index
    %c0_42 = arith.constant 0 : index
    %67 = vector.load %arg2[%c5, %c0_41, %c0_42] : memref<6x128x128xbf16, #tpu.memory_space<vmem>>, vector<1x128x128xbf16>
    %68 = vector.shape_cast %67 : vector<1x128x128xbf16> to vector<128x128xbf16>
    %cst_43 = arith.constant dense<0.000000e+00> : vector<8x128xf32>
    %69 = tpu.matmul %66, %68, %cst_43 {dimension_numbers = #tpu.dot_dimension_numbers<[1], [0], [0], [1], [0, 0, 1, 1], [], []>} : vector<8x128xbf16>, vector<128x128xbf16>, vector<8x128xf32> -> vector<8x128xf32>
    %c5_44 = arith.constant 5 : index
    %c0_45 = arith.constant 0 : index
    %c0_46 = arith.constant 0 : index
    %70 = vector.load %arg3[%c5_44, %c0_45, %c0_46] : memref<6x1x128xf32, #tpu.memory_space<vmem>>, vector<1x1x128xf32>
    %71 = vector.shape_cast %70 : vector<1x1x128xf32> to vector<1x128xf32>
    %72 = vector.broadcast %71 : vector<1x128xf32> to vector<8x128xf32>
    %73 = arith.addf %69, %72 : vector<8x128xf32>
    %cst_47 = arith.constant 0.000000e+00 : f32
    %74 = vector.broadcast %cst_47 : f32 to vector<8x128xf32>
    %75 = arith.maximumf %73, %74 : vector<8x128xf32>
    %76 = math.absf %73 : vector<8x128xf32>
    %cst_48 = arith.constant 0.000000e+00 : f32
    %77 = vector.broadcast %cst_48 : f32 to vector<8x128xf32>
    %78 = arith.subf %77, %76 : vector<8x128xf32>
    %79 = math.exp %78 : vector<8x128xf32>
    %80 = math.log1p %79 : vector<8x128xf32>
    %81 = arith.addf %75, %80 : vector<8x128xf32>
    %82 = tpu.iota {dimensions = array<i32: 1>} : vector<8x128xi32>
    %c32_i32 = arith.constant 32 : i32
    %83 = vector.broadcast %c32_i32 : i32 to vector<8x128xi32>
    %84 = arith.cmpi slt, %82, %83 : vector<8x128xi32>
    %c8_i32 = arith.constant 8 : i32
    %c0_i32 = arith.constant 0 : i32
    %85 = arith.cmpi eq, %c8_i32, %c0_i32 : i32
    %c1_i32 = arith.constant 1 : i32
    %86 = arith.select %85, %c1_i32, %c8_i32 : i32
    %87 = vector.broadcast %86 : i32 to vector<8x128xi32>
    %88 = arith.remsi %82, %87 : vector<8x128xi32>
    %c0_i32_49 = arith.constant 0 : i32
    %89 = vector.broadcast %c0_i32_49 : i32 to vector<8x128xi32>
    %90 = arith.cmpi ne, %88, %89 : vector<8x128xi32>
    %c0_i32_50 = arith.constant 0 : i32
    %91 = vector.broadcast %c0_i32_50 : i32 to vector<8x128xi32>
    %92 = arith.cmpi slt, %88, %91 : vector<8x128xi32>
    %c0_i32_51 = arith.constant 0 : i32
    %93 = arith.cmpi slt, %86, %c0_i32_51 : i32
    %94 = vector.broadcast %93 : i1 to vector<8x128xi1>
    %95 = vector.broadcast %94 : vector<8x128xi1> to vector<8x128xi1>
    %96 = arith.xori %92, %95 : vector<8x128xi1>
    %97 = arith.andi %96, %90 : vector<8x128xi1>
    %98 = vector.broadcast %86 : i32 to vector<8x128xi32>
    %99 = arith.addi %88, %98 : vector<8x128xi32>
    %100 = arith.select %97, %99, %88 : vector<8x128xi1>, vector<8x128xi32>
    %c4_i32 = arith.constant 4 : i32
    %101 = vector.broadcast %c4_i32 : i32 to vector<8x128xi32>
    %102 = arith.cmpi slt, %100, %101 : vector<8x128xi32>
    %103 = arith.andi %84, %102 : vector<8x128xi1>
    %cst_52 = arith.constant 0.000000e+00 : f32
    %104 = vector.broadcast %cst_52 : f32 to vector<8x128xf32>
    %105 = arith.select %103, %81, %104 : vector<8x128xi1>, vector<8x128xf32>
    %c8_i32_53 = arith.constant 8 : i32
    %106 = tpu.dynamic_rotate %105 by %c8_i32_53 dim 1 : vector<8x128xf32>, i32 -> vector<8x128xf32>
    %c120_i32 = arith.constant 120 : i32
    %107 = tpu.dynamic_rotate %105 by %c120_i32 dim 1 : vector<8x128xf32>, i32 -> vector<8x128xf32>
    %108 = arith.addf %106, %107 : vector<8x128xf32>
    %109 = arith.addf %105, %108 : vector<8x128xf32>
    %c16_i32 = arith.constant 16 : i32
    %110 = tpu.dynamic_rotate %105 by %c16_i32 dim 1 : vector<8x128xf32>, i32 -> vector<8x128xf32>
    %c112_i32 = arith.constant 112 : i32
    %111 = tpu.dynamic_rotate %105 by %c112_i32 dim 1 : vector<8x128xf32>, i32 -> vector<8x128xf32>
    %112 = arith.addf %110, %111 : vector<8x128xf32>
    %113 = arith.addf %109, %112 : vector<8x128xf32>
    %c24_i32 = arith.constant 24 : i32
    %114 = tpu.dynamic_rotate %105 by %c24_i32 dim 1 : vector<8x128xf32>, i32 -> vector<8x128xf32>
    %c104_i32 = arith.constant 104 : i32
    %115 = tpu.dynamic_rotate %105 by %c104_i32 dim 1 : vector<8x128xf32>, i32 -> vector<8x128xf32>
    %116 = arith.addf %114, %115 : vector<8x128xf32>
    %117 = arith.addf %113, %116 : vector<8x128xf32>
    %cst_54 = arith.constant 9.99999993E-9 : f32
    %118 = vector.broadcast %cst_54 : f32 to vector<8x128xf32>
    %119 = arith.maximumf %117, %118 : vector<8x128xf32>
    %120 = tpu.reciprocal %119 : vector<8x128xf32> -> vector<8x128xf32>
    %121 = arith.mulf %105, %120 : vector<8x128xf32>
    %c1_i32_55 = arith.constant 1 : i32
    %122 = tpu.dynamic_rotate %121 by %c1_i32_55 dim 1 : vector<8x128xf32>, i32 -> vector<8x128xf32>
    %c127_i32 = arith.constant 127 : i32
    %123 = tpu.dynamic_rotate %121 by %c127_i32 dim 1 : vector<8x128xf32>, i32 -> vector<8x128xf32>
    %124 = arith.addf %122, %123 : vector<8x128xf32>
    %125 = arith.addf %121, %124 : vector<8x128xf32>
    %c2_i32 = arith.constant 2 : i32
    %126 = tpu.dynamic_rotate %121 by %c2_i32 dim 1 : vector<8x128xf32>, i32 -> vector<8x128xf32>
    %c126_i32 = arith.constant 126 : i32
    %127 = tpu.dynamic_rotate %121 by %c126_i32 dim 1 : vector<8x128xf32>, i32 -> vector<8x128xf32>
    %128 = arith.addf %126, %127 : vector<8x128xf32>
    %129 = arith.addf %125, %128 : vector<8x128xf32>
    %c3_i32 = arith.constant 3 : i32
    %130 = tpu.dynamic_rotate %121 by %c3_i32 dim 1 : vector<8x128xf32>, i32 -> vector<8x128xf32>
    %c125_i32 = arith.constant 125 : i32
    %131 = tpu.dynamic_rotate %121 by %c125_i32 dim 1 : vector<8x128xf32>, i32 -> vector<8x128xf32>
    %132 = arith.addf %130, %131 : vector<8x128xf32>
    %133 = arith.addf %129, %132 : vector<8x128xf32>
    %cst_56 = arith.constant 9.99999993E-9 : f32
    %134 = vector.broadcast %cst_56 : f32 to vector<8x128xf32>
    %135 = arith.maximumf %133, %134 : vector<8x128xf32>
    %136 = tpu.reciprocal %135 : vector<8x128xf32> -> vector<8x128xf32>
    %137 = arith.mulf %121, %136 : vector<8x128xf32>
    %c0_57 = arith.constant 0 : index
    %c0_58 = arith.constant 0 : index
    %138 = vector.load %arg4[%c0_57, %c0_58] : memref<8x128xf32, #tpu.memory_space<vmem>>, vector<8x128xf32>
    tpu.vector_store %arg4[%c0_57, %c0_58], %137 {strides = array<i32>} : memref<8x128xf32, #tpu.memory_space<vmem>>, vector<8x128xf32>,
    return
  }
  func.func @transform_0(%arg0: i32) -> (i32, i32) {
    %c0_i32 = arith.constant 0 : i32
    %c0_i32_0 = arith.constant 0 : i32
    return %arg0, %c0_i32 : i32, i32
  }
  func.func @transform_1(%arg0: i32) -> (i32, i32, i32) {
    %c0_i32 = arith.constant 0 : i32
    %c0_i32_0 = arith.constant 0 : i32
    %c0_i32_1 = arith.constant 0 : i32
    %c0_i32_2 = arith.constant 0 : i32
    return %c0_i32, %c0_i32_0, %c0_i32_1 : i32, i32, i32
  }
  func.func @transform_2(%arg0: i32) -> (i32, i32, i32) {
    %c0_i32 = arith.constant 0 : i32
    %c0_i32_0 = arith.constant 0 : i32
    %c0_i32_1 = arith.constant 0 : i32
    %c0_i32_2 = arith.constant 0 : i32
    return %c0_i32, %c0_i32_0, %c0_i32_1 : i32, i32, i32
  }
  func.func @transform_3(%arg0: i32) -> (i32, i32) {
    %c0_i32 = arith.constant 0 : i32
    %c0_i32_0 = arith.constant 0 : i32
    return %arg0, %c0_i32 : i32, i32
  }
}

</mosaic_0001>

<llo_original>
// kernel: tpu_custom_call.1
$region0: #{tpu_custom_call.1}
  #allocation0 [shape = 'u32[]', space=smem, size = 0x4, offset = 0x4, fixed_abs, tag = 'smem constant byte address 0x4 - core index']
  #allocation1 [shape = 'u32[144,128]{1,0:T(1,128)}', space=vmem, size = 0x12000, scoped, tag = 'internal scratch']
  %s0 = inlined_call_operand.hbm [shape: f32[8,128], index: 0, kind: input, shape index: {}]
  %s1 = inlined_call_operand.hbm [shape: bf16[6,128,128], index: 1, kind: input, shape index: {}]
  %s2 = inlined_call_operand.vmem [shape: f32[6,1,128], index: 2, kind: input, shape index: {}]
  %s3 = inlined_call_operand.hbm [shape: f32[8,128], index: 3, kind: output, shape index: {}]
  %s4 = sld [smem:[#allocation0]]
  $region30: #{tpu_custom_call.1} parent=0
    _
  %s6 = ssub.s32 1, %s4
  %s7 = scalar_select 0, %s6, %s4
  $region1: #{tpu_custom_call.1} parent=0
    #allocation2 [shape = 'u8[4096]{0}', space=vmem, size = 0x1000, scoped, tag = 'input window, operand 0, single buffered']
    #allocation3 [shape = 's32[1]{0}', space=sflag, size = 0x4, scoped, tag = 'scoped memory for tpu_custom_call.1']
    #allocation4 [shape = 's32[1]{0}', space=sflag, size = 0x4, scoped, tag = 'scoped memory for tpu_custom_call.1']
    #allocation5 [shape = 'u8[196608]{0}', space=vmem, size = 0x30000, scoped, tag = 'input window, operand 1, single buffered']
    #allocation6 [shape = 's32[1]{0}', space=sflag, size = 0x4, scoped, tag = 'scoped memory for tpu_custom_call.1']
    #allocation7 [shape = 'u8[4096]{0}', space=vmem, size = 0x1000, scoped, tag = 'output window, operand 0, single buffered']
    %8 = vsyncpa [#allocation3], 0
    %9 = vsyncpa [#allocation6], 0
    %10 = vsyncpa [#allocation4], 0
    // Predicated region
    $region2: #{tpu_custom_call.1} parent=1 // pred_check
      _
    $region3: #{tpu_custom_call.1} parent=1 // pred_check_branch
      %12 = sbr.rel (0) target = $region5
    $region4: #{tpu_custom_call.1} parent=1 // pred_region
      %s14 = ssub.s32 128, 128
      %15 = vsyncadd [#allocation3], %s14
      %s17 = sshll.u32 [#allocation2], 4
      %s18 = int_to_ptr.vmem [resolvable:$true] %s17
      %20 = dma.hbm_to_vmem [thread:$0]  %s0, 128, %s18, [#allocation3]
    $region5: #{tpu_custom_call.1} parent=1 // pred_fallthru
      _
    // Predicated region
    $region6: #{tpu_custom_call.1} parent=1 // pred_check
      _
    $region7: #{tpu_custom_call.1} parent=1 // pred_check_branch
      %22 = sbr.rel (0) target = $region9
    $region8: #{tpu_custom_call.1} parent=1 // pred_region
      %s24 = ssub.s32 6144, 6144
      %25 = vsyncadd [#allocation6], %s24
      %s26 = sshll.u32 [#allocation5], 4
      %s27 = int_to_ptr.vmem [resolvable:$true] %s26
      %32 = dma.hbm_to_vmem [thread:$0]  %s1, 6144, %s27, [#allocation6], 64, 64, 4
    $region9: #{tpu_custom_call.1} parent=1 // pred_fallthru
      _
    // Predicated region
    $region10: #{tpu_custom_call.1} parent=1 // pred_check
      _
    $region11: #{tpu_custom_call.1} parent=1 // pred_check_branch
      %34 = sbr.rel (0) target = $region13
    $region12: #{tpu_custom_call.1} parent=1 // pred_region
      _
    $region13: #{tpu_custom_call.1} parent=1 // pred_fallthru
      _
    // Predicated region
    $region14: #{tpu_custom_call.1} parent=1 // pred_check
      _
    $region15: #{tpu_custom_call.1} parent=1 // pred_check_branch
      %36 = sbr.rel (0) target = $region17
    $region16: #{tpu_custom_call.1} parent=1 // pred_region
      %37 = dma.done [#allocation3], 128
    $region17: #{tpu_custom_call.1} parent=1 // pred_fallthru
      _
    // Predicated region
    $region18: #{tpu_custom_call.1} parent=1 // pred_check
      _
    $region19: #{tpu_custom_call.1} parent=1 // pred_check_branch
      %39 = sbr.rel (0) target = $region21
    $region20: #{tpu_custom_call.1} parent=1 // pred_region
      %40 = dma.done [#allocation6], 6144
    $region21: #{tpu_custom_call.1} parent=1 // pred_fallthru
      _
    %v42 = vld [vmem:[#allocation2] sm:$0xff]
    %v43 = vpack.c.bf16 %v42, %v42
    %v44 = vld [vmem:[#allocation5] sm:$0xf]
    %v45 = vld [vmem:[#allocation5 + $0x4] sm:$0xf]
    %v46 = vld [vmem:[#allocation5 + $0x8] sm:$0xf]
    %v47 = vld [vmem:[#allocation5 + $0xc] sm:$0xf]
    %v48 = vld [vmem:[#allocation5 + $0x10] sm:$0xf]
    %v49 = vld [vmem:[#allocation5 + $0x14] sm:$0xf]
    %v50 = vld [vmem:[#allocation5 + $0x18] sm:$0xf]
    %v51 = vld [vmem:[#allocation5 + $0x1c] sm:$0xf]
    %v52 = vld [vmem:[#allocation5 + $0x20] sm:$0xf]
    %v53 = vld [vmem:[#allocation5 + $0x24] sm:$0xf]
    %v54 = vld [vmem:[#allocation5 + $0x28] sm:$0xf]
    %v55 = vld [vmem:[#allocation5 + $0x2c] sm:$0xf]
    %v56 = vld [vmem:[#allocation5 + $0x30] sm:$0xf]
    %v57 = vld [vmem:[#allocation5 + $0x34] sm:$0xf]
    %v58 = vld [vmem:[#allocation5 + $0x38] sm:$0xf]
    %v59 = vld [vmem:[#allocation5 + $0x3c] sm:$0xf]
    %v60 = vld [vmem:[%s2] sm:$0x1]
    %v62 = vlaneseq
    %v63 = vshrl.u32 %v62, 7
    %v64 = vsub.s32 0, %v63
    %v65 = vrot.slane %v60, %v64
    %v83 = vunpack.c.l.b16 %v44
    %v84 = vunpack.c.l.b16 %v45
    %v85 = vunpack.c.l.b16 %v46
    %v86 = vunpack.c.l.b16 %v47
    %v87 = vunpack.c.l.b16 %v48
    %v88 = vunpack.c.l.b16 %v49
    %v89 = vunpack.c.l.b16 %v50
    %v90 = vunpack.c.l.b16 %v51
    %v91 = vunpack.c.l.b16 %v52
    %v92 = vunpack.c.l.b16 %v53
    %v93 = vunpack.c.l.b16 %v54
    %v94 = vunpack.c.l.b16 %v55
    %v95 = vunpack.c.l.b16 %v56
    %v96 = vunpack.c.l.b16 %v57
    %v97 = vunpack.c.l.b16 %v58
    %v98 = vunpack.c.l.b16 %v59
    %v99 = vpack.c.b16 %v84, %v83
    %v100 = vpack.c.b16 %v86, %v85
    %v101 = vpack.c.b16 %v88, %v87
    %v102 = vpack.c.b16 %v90, %v89
    %v103 = vpack.c.b16 %v92, %v91
    %v104 = vpack.c.b16 %v94, %v93
    %v105 = vpack.c.b16 %v96, %v95
    %v106 = vpack.c.b16 %v98, %v97
    %115 = vmatprep.subr.bf16.mxu0 0
    %116 = vmatpush1.bf16.msra.mxu0 %v99
    %117 = vmatprep.subr.bf16.mxu0 0
    %118 = vmatpush1.bf16.msra.mxu0 %v100
    %119 = vmatprep.subr.bf16.mxu0 0
    %120 = vmatpush1.bf16.msra.mxu0 %v101
    %121 = vmatprep.subr.bf16.mxu0 0
    %122 = vmatpush1.bf16.msra.mxu0 %v102
    %123 = vmatprep.subr.bf16.mxu0 0
    %124 = vmatpush1.bf16.msra.mxu0 %v103
    %125 = vmatprep.subr.bf16.mxu0 0
    %126 = vmatpush1.bf16.msra.mxu0 %v104
    %127 = vmatprep.subr.bf16.mxu0 0
    %128 = vmatpush1.bf16.msra.mxu0 %v105
    %129 = vmatprep.subr.bf16.mxu0 0
    %130 = vmatpush1.bf16.msra.mxu0 %v106
    %131 = vmatprep.subr.bf16.mxu0 0
    %132 = vmatpush1.bf16.msra.mxu0 0
    %133 = vmatprep.subr.bf16.mxu0 0
    %134 = vmatpush1.bf16.msra.mxu0 0
    %135 = vmatprep.subr.bf16.mxu0 0
    %136 = vmatpush1.bf16.msra.mxu0 0
    %137 = vmatprep.subr.bf16.mxu0 0
    %138 = vmatpush1.bf16.msra.mxu0 0
    %139 = vmatprep.subr.bf16.mxu0 0
    %140 = vmatpush1.bf16.msra.mxu0 0
    %141 = vmatprep.subr.bf16.mxu0 0
    %142 = vmatpush1.bf16.msra.mxu0 0
    %143 = vmatprep.subr.bf16.mxu0 0
    %144 = vmatpush1.bf16.msra.mxu0 0
    %145 = vmatprep.subr.bf16.mxu0 0
    %146 = vmatpush1.bf16.msra.mxu0 0
    %147 = vmatprep.mubr.bf16.mxu0 0
    %148 = vmatmul.mubr.bf16.gmra.mrb[0].mxu0 %v43
    %v149 = vpop.f32.mrb[0].mxu0
    %v150 = vadd.f32 %v65, %v149
    %v151 = vpop.f32.mrb[0].mxu0
    %v152 = vpop.f32.mrb[0].mxu0
    %v153 = vpop.f32.mrb[0].mxu0
    %154 = vdwg.mxu0
    %vm155 = vcmp.gt.f32.partialorder %v150, 0.0
    %v156 = vmul.f32 %v150, 0.01
    %v157 = vsel %vm155, %v150, %v156
    %v158 = vpack.c.bf16 %v157, %v157
    %s159 = scalar_lea.vmem [#allocation5], 64
    %v160 = vld [vmem:[%s159] sm:$0xf]
    %v161 = vld [vmem:[%s159 + $0x4] sm:$0xf]
    %v162 = vld [vmem:[%s159 + $0x8] sm:$0xf]
    %v163 = vld [vmem:[%s159 + $0xc] sm:$0xf]
    %v164 = vld [vmem:[%s159 + $0x10] sm:$0xf]
    %v165 = vld [vmem:[%s159 + $0x14] sm:$0xf]
    %v166 = vld [vmem:[%s159 + $0x18] sm:$0xf]
    %v167 = vld [vmem:[%s159 + $0x1c] sm:$0xf]
    %v168 = vld [vmem:[%s159 + $0x20] sm:$0xf]
    %v169 = vld [vmem:[%s159 + $0x24] sm:$0xf]
    %v170 = vld [vmem:[%s159 + $0x28] sm:$0xf]
    %v171 = vld [vmem:[%s159 + $0x2c] sm:$0xf]
    %v172 = vld [vmem:[%s159 + $0x30] sm:$0xf]
    %v173 = vld [vmem:[%s159 + $0x34] sm:$0xf]
    %v174 = vld [vmem:[%s159 + $0x38] sm:$0xf]
    %v175 = vld [vmem:[%s159 + $0x3c] sm:$0xf]
    %s176 = scalar_lea.vmem %s2, 1
    %v177 = vld [vmem:[%s176] sm:$0x1]
    %v179 = vlaneseq
    %v180 = vshrl.u32 %v179, 7
    %v181 = vsub.s32 0, %v180
    %v182 = vrot.slane %v177, %v181
    %v200 = vunpack.c.l.b16 %v160
    %v201 = vunpack.c.l.b16 %v161
    %v202 = vunpack.c.l.b16 %v162
    %v203 = vunpack.c.l.b16 %v163
    %v204 = vunpack.c.l.b16 %v164
    %v205 = vunpack.c.l.b16 %v165
    %v206 = vunpack.c.l.b16 %v166
    %v207 = vunpack.c.l.b16 %v167
    %v208 = vunpack.c.l.b16 %v168
    %v209 = vunpack.c.l.b16 %v169
    %v210 = vunpack.c.l.b16 %v170
    %v211 = vunpack.c.l.b16 %v171
    %v212 = vunpack.c.l.b16 %v172
    %v213 = vunpack.c.l.b16 %v173
    %v214 = vunpack.c.l.b16 %v174
    %v215 = vunpack.c.l.b16 %v175
    %v216 = vpack.c.b16 %v201, %v200
    %v217 = vpack.c.b16 %v203, %v202
    %v218 = vpack.c.b16 %v205, %v204
    %v219 = vpack.c.b16 %v207, %v206
    %v220 = vpack.c.b16 %v209, %v208
    %v221 = vpack.c.b16 %v211, %v210
    %v222 = vpack.c.b16 %v213, %v212
    %v223 = vpack.c.b16 %v215, %v214
    %232 = vmatprep.subr.bf16.mxu0 0
    %233 = vmatpush1.bf16.msra.mxu0 %v216
    %234 = vmatprep.subr.bf16.mxu0 0
    %235 = vmatpush1.bf16.msra.mxu0 %v217
    %236 = vmatprep.subr.bf16.mxu0 0
    %237 = vmatpush1.bf16.msra.mxu0 %v218
    %238 = vmatprep.subr.bf16.mxu0 0
    %239 = vmatpush1.bf16.msra.mxu0 %v219
    %240 = vmatprep.subr.bf16.mxu0 0
    %241 = vmatpush1.bf16.msra.mxu0 %v220
    %242 = vmatprep.subr.bf16.mxu0 0
    %243 = vmatpush1.bf16.msra.mxu0 %v221
    %244 = vmatprep.subr.bf16.mxu0 0
    %245 = vmatpush1.bf16.msra.mxu0 %v222
    %246 = vmatprep.subr.bf16.mxu0 0
    %247 = vmatpush1.bf16.msra.mxu0 %v223
    %248 = vmatprep.subr.bf16.mxu0 0
    %249 = vmatpush1.bf16.msra.mxu0 0
    %250 = vmatprep.subr.bf16.mxu0 0
    %251 = vmatpush1.bf16.msra.mxu0 0
    %252 = vmatprep.subr.bf16.mxu0 0
    %253 = vmatpush1.bf16.msra.mxu0 0
    %254 = vmatprep.subr.bf16.mxu0 0
    %255 = vmatpush1.bf16.msra.mxu0 0
    %256 = vmatprep.subr.bf16.mxu0 0
    %257 = vmatpush1.bf16.msra.mxu0 0
    %258 = vmatprep.subr.bf16.mxu0 0
    %259 = vmatpush1.bf16.msra.mxu0 0
    %260 = vmatprep.subr.bf16.mxu0 0
    %261 = vmatpush1.bf16.msra.mxu0 0
    %262 = vmatprep.subr.bf16.mxu0 0
    %263 = vmatpush1.bf16.msra.mxu0 0
    %264 = vmatprep.mubr.bf16.mxu0 0
    %265 = vmatmul.mubr.bf16.gmra.mrb[0].mxu0 %v158
    %v266 = vpop.f32.mrb[0].mxu0
    %v267 = vadd.f32 %v182, %v266
    %v268 = vpop.f32.mrb[0].mxu0
    %v269 = vpop.f32.mrb[0].mxu0
    %v270 = vpop.f32.mrb[0].mxu0
    %271 = vdwg.mxu0
    %vm272 = vcmp.gt.f32.partialorder %v267, 0.0
    %v273 = vmul.f32 %v267, 0.01
    %v274 = vsel %vm272, %v267, %v273
    %v275 = vpack.c.bf16 %v274, %v274
    %s276 = scalar_lea.vmem [#allocation5], 128
    %v277 = vld [vmem:[%s276] sm:$0xf]
    %v278 = vld [vmem:[%s276 + $0x4] sm:$0xf]
    %v279 = vld [vmem:[%s276 + $0x8] sm:$0xf]
    %v280 = vld [vmem:[%s276 + $0xc] sm:$0xf]
    %v281 = vld [vmem:[%s276 + $0x10] sm:$0xf]
    %v282 = vld [vmem:[%s276 + $0x14] sm:$0xf]
    %v283 = vld [vmem:[%s276 + $0x18] sm:$0xf]
    %v284 = vld [vmem:[%s276 + $0x1c] sm:$0xf]
    %v285 = vld [vmem:[%s276 + $0x20] sm:$0xf]
    %v286 = vld [vmem:[%s276 + $0x24] sm:$0xf]
    %v287 = vld [vmem:[%s276 + $0x28] sm:$0xf]
    %v288 = vld [vmem:[%s276 + $0x2c] sm:$0xf]
    %v289 = vld [vmem:[%s276 + $0x30] sm:$0xf]
    %v290 = vld [vmem:[%s276 + $0x34] sm:$0xf]
    %v291 = vld [vmem:[%s276 + $0x38] sm:$0xf]
    %v292 = vld [vmem:[%s276 + $0x3c] sm:$0xf]
    %s293 = scalar_lea.vmem %s2, 2
    %v294 = vld [vmem:[%s293] sm:$0x1]
    %v296 = vlaneseq
    %v297 = vshrl.u32 %v296, 7
    %v298 = vsub.s32 0, %v297
    %v299 = vrot.slane %v294, %v298
    %v317 = vunpack.c.l.b16 %v277
    %v318 = vunpack.c.l.b16 %v278
    %v319 = vunpack.c.l.b16 %v279
    %v320 = vunpack.c.l.b16 %v280
    %v321 = vunpack.c.l.b16 %v281
    %v322 = vunpack.c.l.b16 %v282
    %v323 = vunpack.c.l.b16 %v283
    %v324 = vunpack.c.l.b16 %v284
    %v325 = vunpack.c.l.b16 %v285
    %v326 = vunpack.c.l.b16 %v286
    %v327 = vunpack.c.l.b16 %v287
    %v328 = vunpack.c.l.b16 %v288
    %v329 = vunpack.c.l.b16 %v289
    %v330 = vunpack.c.l.b16 %v290
    %v331 = vunpack.c.l.b16 %v291
    %v332 = vunpack.c.l.b16 %v292
    %v333 = vpack.c.b16 %v318, %v317
    %v334 = vpack.c.b16 %v320, %v319
    %v335 = vpack.c.b16 %v322, %v321
    %v336 = vpack.c.b16 %v324, %v323
    %v337 = vpack.c.b16 %v326, %v325
    %v338 = vpack.c.b16 %v328, %v327
    %v339 = vpack.c.b16 %v330, %v329
    %v340 = vpack.c.b16 %v332, %v331
    %349 = vmatprep.subr.bf16.mxu0 0
    %350 = vmatpush1.bf16.msra.mxu0 %v333
    %351 = vmatprep.subr.bf16.mxu0 0
    %352 = vmatpush1.bf16.msra.mxu0 %v334
    %353 = vmatprep.subr.bf16.mxu0 0
    %354 = vmatpush1.bf16.msra.mxu0 %v335
    %355 = vmatprep.subr.bf16.mxu0 0
    %356 = vmatpush1.bf16.msra.mxu0 %v336
    %357 = vmatprep.subr.bf16.mxu0 0
    %358 = vmatpush1.bf16.msra.mxu0 %v337
    %359 = vmatprep.subr.bf16.mxu0 0
    %360 = vmatpush1.bf16.msra.mxu0 %v338
    %361 = vmatprep.subr.bf16.mxu0 0
    %362 = vmatpush1.bf16.msra.mxu0 %v339
    %363 = vmatprep.subr.bf16.mxu0 0
    %364 = vmatpush1.bf16.msra.mxu0 %v340
    %365 = vmatprep.subr.bf16.mxu0 0
    %366 = vmatpush1.bf16.msra.mxu0 0
    %367 = vmatprep.subr.bf16.mxu0 0
    %368 = vmatpush1.bf16.msra.mxu0 0
    %369 = vmatprep.subr.bf16.mxu0 0
    %370 = vmatpush1.bf16.msra.mxu0 0
    %371 = vmatprep.subr.bf16.mxu0 0
    %372 = vmatpush1.bf16.msra.mxu0 0
    %373 = vmatprep.subr.bf16.mxu0 0
    %374 = vmatpush1.bf16.msra.mxu0 0
    %375 = vmatprep.subr.bf16.mxu0 0
    %376 = vmatpush1.bf16.msra.mxu0 0
    %377 = vmatprep.subr.bf16.mxu0 0
    %378 = vmatpush1.bf16.msra.mxu0 0
    %379 = vmatprep.subr.bf16.mxu0 0
    %380 = vmatpush1.bf16.msra.mxu0 0
    %381 = vmatprep.mubr.bf16.mxu0 0
    %382 = vmatmul.mubr.bf16.gmra.mrb[0].mxu0 %v275
    %v383 = vpop.f32.mrb[0].mxu0
    %v384 = vadd.f32 %v299, %v383
    %v385 = vpop.f32.mrb[0].mxu0
    %v386 = vpop.f32.mrb[0].mxu0
    %v387 = vpop.f32.mrb[0].mxu0
    %388 = vdwg.mxu0
    %vm389 = vcmp.gt.f32.partialorder %v384, 0.0
    %v390 = vmul.f32 %v384, 0.01
    %v391 = vsel %vm389, %v384, %v390
    %v392 = vpack.c.bf16 %v391, %v391
    %s393 = scalar_lea.vmem [#allocation5], 192
    %v394 = vld [vmem:[%s393] sm:$0xf]
    %v395 = vld [vmem:[%s393 + $0x4] sm:$0xf]
    %v396 = vld [vmem:[%s393 + $0x8] sm:$0xf]
    %v397 = vld [vmem:[%s393 + $0xc] sm:$0xf]
    %v398 = vld [vmem:[%s393 + $0x10] sm:$0xf]
    %v399 = vld [vmem:[%s393 + $0x14] sm:$0xf]
    %v400 = vld [vmem:[%s393 + $0x18] sm:$0xf]
    %v401 = vld [vmem:[%s393 + $0x1c] sm:$0xf]
    %v402 = vld [vmem:[%s393 + $0x20] sm:$0xf]
    %v403 = vld [vmem:[%s393 + $0x24] sm:$0xf]
    %v404 = vld [vmem:[%s393 + $0x28] sm:$0xf]
    %v405 = vld [vmem:[%s393 + $0x2c] sm:$0xf]
    %v406 = vld [vmem:[%s393 + $0x30] sm:$0xf]
    %v407 = vld [vmem:[%s393 + $0x34] sm:$0xf]
    %v408 = vld [vmem:[%s393 + $0x38] sm:$0xf]
    %v409 = vld [vmem:[%s393 + $0x3c] sm:$0xf]
    %s410 = scalar_lea.vmem %s2, 3
    %v411 = vld [vmem:[%s410] sm:$0x1]
    %v413 = vlaneseq
    %v414 = vshrl.u32 %v413, 7
    %v415 = vsub.s32 0, %v414
    %v416 = vrot.slane %v411, %v415
    %v434 = vunpack.c.l.b16 %v394
    %v435 = vunpack.c.l.b16 %v395
    %v436 = vunpack.c.l.b16 %v396
    %v437 = vunpack.c.l.b16 %v397
    %v438 = vunpack.c.l.b16 %v398
    %v439 = vunpack.c.l.b16 %v399
    %v440 = vunpack.c.l.b16 %v400
    %v441 = vunpack.c.l.b16 %v401
    %v442 = vunpack.c.l.b16 %v402
    %v443 = vunpack.c.l.b16 %v403
    %v444 = vunpack.c.l.b16 %v404
    %v445 = vunpack.c.l.b16 %v405
    %v446 = vunpack.c.l.b16 %v406
    %v447 = vunpack.c.l.b16 %v407
    %v448 = vunpack.c.l.b16 %v408
    %v449 = vunpack.c.l.b16 %v409
    %v450 = vpack.c.b16 %v435, %v434
    %v451 = vpack.c.b16 %v437, %v436
    %v452 = vpack.c.b16 %v439, %v438
    %v453 = vpack.c.b16 %v441, %v440
    %v454 = vpack.c.b16 %v443, %v442
    %v455 = vpack.c.b16 %v445, %v444
    %v456 = vpack.c.b16 %v447, %v446
    %v457 = vpack.c.b16 %v449, %v448
    %466 = vmatprep.subr.bf16.mxu0 0
    %467 = vmatpush1.bf16.msra.mxu0 %v450
    %468 = vmatprep.subr.bf16.mxu0 0
    %469 = vmatpush1.bf16.msra.mxu0 %v451
    %470 = vmatprep.subr.bf16.mxu0 0
    %471 = vmatpush1.bf16.msra.mxu0 %v452
    %472 = vmatprep.subr.bf16.mxu0 0
    %473 = vmatpush1.bf16.msra.mxu0 %v453
    %474 = vmatprep.subr.bf16.mxu0 0
    %475 = vmatpush1.bf16.msra.mxu0 %v454
    %476 = vmatprep.subr.bf16.mxu0 0
    %477 = vmatpush1.bf16.msra.mxu0 %v455
    %478 = vmatprep.subr.bf16.mxu0 0
    %479 = vmatpush1.bf16.msra.mxu0 %v456
    %480 = vmatprep.subr.bf16.mxu0 0
    %481 = vmatpush1.bf16.msra.mxu0 %v457
    %482 = vmatprep.subr.bf16.mxu0 0
    %483 = vmatpush1.bf16.msra.mxu0 0
    %484 = vmatprep.subr.bf16.mxu0 0
    %485 = vmatpush1.bf16.msra.mxu0 0
    %486 = vmatprep.subr.bf16.mxu0 0
    %487 = vmatpush1.bf16.msra.mxu0 0
    %488 = vmatprep.subr.bf16.mxu0 0
    %489 = vmatpush1.bf16.msra.mxu0 0
    %490 = vmatprep.subr.bf16.mxu0 0
    %491 = vmatpush1.bf16.msra.mxu0 0
    %492 = vmatprep.subr.bf16.mxu0 0
    %493 = vmatpush1.bf16.msra.mxu0 0
    %494 = vmatprep.subr.bf16.mxu0 0
    %495 = vmatpush1.bf16.msra.mxu0 0
    %496 = vmatprep.subr.bf16.mxu0 0
    %497 = vmatpush1.bf16.msra.mxu0 0
    %498 = vmatprep.mubr.bf16.mxu0 0
    %499 = vmatmul.mubr.bf16.gmra.mrb[0].mxu0 %v392
    %v500 = vpop.f32.mrb[0].mxu0
    %v501 = vadd.f32 %v416, %v500
    %v502 = vpop.f32.mrb[0].mxu0
    %v503 = vpop.f32.mrb[0].mxu0
    %v504 = vpop.f32.mrb[0].mxu0
    %505 = vdwg.mxu0
    %vm506 = vcmp.gt.f32.partialorder %v501, 0.0
    %v507 = vmul.f32 %v501, 0.01
    %v508 = vsel %vm506, %v501, %v507
    %v509 = vpack.c.bf16 %v508, %v508
    %s510 = scalar_lea.vmem [#allocation5], 256
    %v511 = vld [vmem:[%s510] sm:$0xf]
    %v512 = vld [vmem:[%s510 + $0x4] sm:$0xf]
    %v513 = vld [vmem:[%s510 + $0x8] sm:$0xf]
    %v514 = vld [vmem:[%s510 + $0xc] sm:$0xf]
    %v515 = vld [vmem:[%s510 + $0x10] sm:$0xf]
    %v516 = vld [vmem:[%s510 + $0x14] sm:$0xf]
    %v517 = vld [vmem:[%s510 + $0x18] sm:$0xf]
    %v518 = vld [vmem:[%s510 + $0x1c] sm:$0xf]
    %v519 = vld [vmem:[%s510 + $0x20] sm:$0xf]
    %v520 = vld [vmem:[%s510 + $0x24] sm:$0xf]
    %v521 = vld [vmem:[%s510 + $0x28] sm:$0xf]
    %v522 = vld [vmem:[%s510 + $0x2c] sm:$0xf]
    %v523 = vld [vmem:[%s510 + $0x30] sm:$0xf]
    %v524 = vld [vmem:[%s510 + $0x34] sm:$0xf]
    %v525 = vld [vmem:[%s510 + $0x38] sm:$0xf]
    %v526 = vld [vmem:[%s510 + $0x3c] sm:$0xf]
    %s527 = scalar_lea.vmem %s2, 4
    %v528 = vld [vmem:[%s527] sm:$0x1]
    %v530 = vlaneseq
    %v531 = vshrl.u32 %v530, 7
    %v532 = vsub.s32 0, %v531
    %v533 = vrot.slane %v528, %v532
    %v551 = vunpack.c.l.b16 %v511
    %v552 = vunpack.c.l.b16 %v512
    %v553 = vunpack.c.l.b16 %v513
    %v554 = vunpack.c.l.b16 %v514
    %v555 = vunpack.c.l.b16 %v515
    %v556 = vunpack.c.l.b16 %v516
    %v557 = vunpack.c.l.b16 %v517
    %v558 = vunpack.c.l.b16 %v518
    %v559 = vunpack.c.l.b16 %v519
    %v560 = vunpack.c.l.b16 %v520
    %v561 = vunpack.c.l.b16 %v521
    %v562 = vunpack.c.l.b16 %v522
    %v563 = vunpack.c.l.b16 %v523
    %v564 = vunpack.c.l.b16 %v524
    %v565 = vunpack.c.l.b16 %v525
    %v566 = vunpack.c.l.b16 %v526
    %v567 = vpack.c.b16 %v552, %v551
    %v568 = vpack.c.b16 %v554, %v553
    %v569 = vpack.c.b16 %v556, %v555
    %v570 = vpack.c.b16 %v558, %v557
    %v571 = vpack.c.b16 %v560, %v559
    %v572 = vpack.c.b16 %v562, %v561
    %v573 = vpack.c.b16 %v564, %v563
    %v574 = vpack.c.b16 %v566, %v565
    %583 = vmatprep.subr.bf16.mxu0 0
    %584 = vmatpush1.bf16.msra.mxu0 %v567
    %585 = vmatprep.subr.bf16.mxu0 0
    %586 = vmatpush1.bf16.msra.mxu0 %v568
    %587 = vmatprep.subr.bf16.mxu0 0
    %588 = vmatpush1.bf16.msra.mxu0 %v569
    %589 = vmatprep.subr.bf16.mxu0 0
    %590 = vmatpush1.bf16.msra.mxu0 %v570
    %591 = vmatprep.subr.bf16.mxu0 0
    %592 = vmatpush1.bf16.msra.mxu0 %v571
    %593 = vmatprep.subr.bf16.mxu0 0
    %594 = vmatpush1.bf16.msra.mxu0 %v572
    %595 = vmatprep.subr.bf16.mxu0 0
    %596 = vmatpush1.bf16.msra.mxu0 %v573
    %597 = vmatprep.subr.bf16.mxu0 0
    %598 = vmatpush1.bf16.msra.mxu0 %v574
    %599 = vmatprep.subr.bf16.mxu0 0
    %600 = vmatpush1.bf16.msra.mxu0 0
    %601 = vmatprep.subr.bf16.mxu0 0
    %602 = vmatpush1.bf16.msra.mxu0 0
    %603 = vmatprep.subr.bf16.mxu0 0
    %604 = vmatpush1.bf16.msra.mxu0 0
    %605 = vmatprep.subr.bf16.mxu0 0
    %606 = vmatpush1.bf16.msra.mxu0 0
    %607 = vmatprep.subr.bf16.mxu0 0
    %608 = vmatpush1.bf16.msra.mxu0 0
    %609 = vmatprep.subr.bf16.mxu0 0
    %610 = vmatpush1.bf16.msra.mxu0 0
    %611 = vmatprep.subr.bf16.mxu0 0
    %612 = vmatpush1.bf16.msra.mxu0 0
    %613 = vmatprep.subr.bf16.mxu0 0
    %614 = vmatpush1.bf16.msra.mxu0 0
    %615 = vmatprep.mubr.bf16.mxu0 0
    %616 = vmatmul.mubr.bf16.gmra.mrb[0].mxu0 %v509
    %v617 = vpop.f32.mrb[0].mxu0
    %v618 = vadd.f32 %v533, %v617
    %v619 = vpop.f32.mrb[0].mxu0
    %v620 = vpop.f32.mrb[0].mxu0
    %v621 = vpop.f32.mrb[0].mxu0
    %622 = vdwg.mxu0
    %vm623 = vcmp.gt.f32.partialorder %v618, 0.0
    %v624 = vmul.f32 %v618, 0.01
    %v625 = vsel %vm623, %v618, %v624
    %v626 = vpack.c.bf16 %v625, %v625
    %s627 = scalar_lea.vmem [#allocation5], 320
    %v628 = vld [vmem:[%s627] sm:$0xf]
    %v629 = vld [vmem:[%s627 + $0x4] sm:$0xf]
    %v630 = vld [vmem:[%s627 + $0x8] sm:$0xf]
    %v631 = vld [vmem:[%s627 + $0xc] sm:$0xf]
    %v632 = vld [vmem:[%s627 + $0x10] sm:$0xf]
    %v633 = vld [vmem:[%s627 + $0x14] sm:$0xf]
    %v634 = vld [vmem:[%s627 + $0x18] sm:$0xf]
    %v635 = vld [vmem:[%s627 + $0x1c] sm:$0xf]
    %v636 = vld [vmem:[%s627 + $0x20] sm:$0xf]
    %v637 = vld [vmem:[%s627 + $0x24] sm:$0xf]
    %v638 = vld [vmem:[%s627 + $0x28] sm:$0xf]
    %v639 = vld [vmem:[%s627 + $0x2c] sm:$0xf]
    %v640 = vld [vmem:[%s627 + $0x30] sm:$0xf]
    %v641 = vld [vmem:[%s627 + $0x34] sm:$0xf]
    %v642 = vld [vmem:[%s627 + $0x38] sm:$0xf]
    %v643 = vld [vmem:[%s627 + $0x3c] sm:$0xf]
    %s644 = scalar_lea.vmem %s2, 5
    %v645 = vld [vmem:[%s644] sm:$0x1]
    %v647 = vlaneseq
    %v648 = vshrl.u32 %v647, 7
    %v649 = vsub.s32 0, %v648
    %v650 = vrot.slane %v645, %v649
    %v668 = vunpack.c.l.b16 %v628
    %v669 = vunpack.c.l.b16 %v629
    %v670 = vunpack.c.l.b16 %v630
    %v671 = vunpack.c.l.b16 %v631
    %v672 = vunpack.c.l.b16 %v632
    %v673 = vunpack.c.l.b16 %v633
    %v674 = vunpack.c.l.b16 %v634
    %v675 = vunpack.c.l.b16 %v635
    %v676 = vunpack.c.l.b16 %v636
    %v677 = vunpack.c.l.b16 %v637
    %v678 = vunpack.c.l.b16 %v638
    %v679 = vunpack.c.l.b16 %v639
    %v680 = vunpack.c.l.b16 %v640
    %v681 = vunpack.c.l.b16 %v641
    %v682 = vunpack.c.l.b16 %v642
    %v683 = vunpack.c.l.b16 %v643
    %v684 = vpack.c.b16 %v669, %v668
    %v685 = vpack.c.b16 %v671, %v670
    %v686 = vpack.c.b16 %v673, %v672
    %v687 = vpack.c.b16 %v675, %v674
    %v688 = vpack.c.b16 %v677, %v676
    %v689 = vpack.c.b16 %v679, %v678
    %v690 = vpack.c.b16 %v681, %v680
    %v691 = vpack.c.b16 %v683, %v682
    %700 = vmatprep.subr.bf16.mxu0 0
    %701 = vmatpush1.bf16.msra.mxu0 %v684
    %702 = vmatprep.subr.bf16.mxu0 0
    %703 = vmatpush1.bf16.msra.mxu0 %v685
    %704 = vmatprep.subr.bf16.mxu0 0
    %705 = vmatpush1.bf16.msra.mxu0 %v686
    %706 = vmatprep.subr.bf16.mxu0 0
    %707 = vmatpush1.bf16.msra.mxu0 %v687
    %708 = vmatprep.subr.bf16.mxu0 0
    %709 = vmatpush1.bf16.msra.mxu0 %v688
    %710 = vmatprep.subr.bf16.mxu0 0
    %711 = vmatpush1.bf16.msra.mxu0 %v689
    %712 = vmatprep.subr.bf16.mxu0 0
    %713 = vmatpush1.bf16.msra.mxu0 %v690
    %714 = vmatprep.subr.bf16.mxu0 0
    %715 = vmatpush1.bf16.msra.mxu0 %v691
    %716 = vmatprep.subr.bf16.mxu0 0
    %717 = vmatpush1.bf16.msra.mxu0 0
    %718 = vmatprep.subr.bf16.mxu0 0
    %719 = vmatpush1.bf16.msra.mxu0 0
    %720 = vmatprep.subr.bf16.mxu0 0
    %721 = vmatpush1.bf16.msra.mxu0 0
    %722 = vmatprep.subr.bf16.mxu0 0
    %723 = vmatpush1.bf16.msra.mxu0 0
    %724 = vmatprep.subr.bf16.mxu0 0
    %725 = vmatpush1.bf16.msra.mxu0 0
    %726 = vmatprep.subr.bf16.mxu0 0
    %727 = vmatpush1.bf16.msra.mxu0 0
    %728 = vmatprep.subr.bf16.mxu0 0
    %729 = vmatpush1.bf16.msra.mxu0 0
    %730 = vmatprep.subr.bf16.mxu0 0
    %731 = vmatpush1.bf16.msra.mxu0 0
    %732 = vmatprep.mubr.bf16.mxu0 0
    %733 = vmatmul.mubr.bf16.gmra.mrb[0].mxu0 %v626
    %v734 = vpop.f32.mrb[0].mxu0
    %v735 = vadd.f32 %v650, %v734
    %v736 = vpop.f32.mrb[0].mxu0
    %v737 = vpop.f32.mrb[0].mxu0
    %v738 = vpop.f32.mrb[0].mxu0
    %739 = vdwg.mxu0
    %v740 = vmax.f32 %v735, 0.0
    %v741 = vand.u32 2147483647, %v735
    %v742 = vsub.f32 0.0, %v741
    %v743 = vmul.f32 %v742, 1.442695
    %v744 = vpow.pop %v743
    %v745 = vadd.f32 %v744, 1.0
    %v746 = vlog2.pop %v745
    %v747 = vmul.f32 %v746, 0.6931472
    %v748 = vmul.f32 -0.5, %v744
    %v749 = vadd.f32 %v748, 1.0
    %v750 = vmul.f32 %v749, %v744
    %v751 = vand.u32 2147483647, %v744
    %vm752 = vcmp.lt.f32.partialorder %v751, 0.0004427343
    %v753 = vsel %vm752, %v750, %v747
    %v754 = vadd.f32 %v740, %v753
    %v755 = vlaneseq
    %v756 = vand.u32 %v755, 127
    %vm757 = vcmp.lt.s32.totalorder %v756, 32
    %vm758 = vcmp.lt.s32.totalorder %v756, 0
    %v759 = vsub.s32 0, %v756
    %v760 = vsel %vm758, %v759, %v756
    %v761 = vshrl.u32 %v760, 3
    %v762 = vand.u32 %v760, 7
    %v763 = vsub.s32 0, %v762
    %v764 = vsel %vm758, %v763, %v762
    %vm765 = vcmp.ne.s32.totalorder %v764, 0
    %vm766 = vcmp.lt.s32.totalorder %v764, 0
    %vm767 = vmand %vm766, %vm765
    %v768 = vadd.s32 %v764, 8
    %v769 = vsel %vm767, %v768, %v764
    %vm770 = vcmp.lt.s32.totalorder %v769, 4
    %vm771 = vmand %vm757, %vm770
    %v772 = vsel %vm771, %v754, 0.0
    %773 = vrot.lane.b32.xlu0 %v772, 8
    %v774 = vpop.permute.xlu0 %773
    %775 = vrot.lane.b32.xlu0 %v772, 120
    %v776 = vpop.permute.xlu0 %775
    %v777 = vadd.f32 %v774, %v776
    %v778 = vadd.f32 %v772, %v777
    %779 = vrot.lane.b32.xlu0 %v772, 16
    %v780 = vpop.permute.xlu0 %779
    %781 = vrot.lane.b32.xlu0 %v772, 112
    %v782 = vpop.permute.xlu0 %781
    %v783 = vadd.f32 %v780, %v782
    %v784 = vadd.f32 %v778, %v783
    %785 = vrot.lane.b32.xlu0 %v772, 24
    %v786 = vpop.permute.xlu0 %785
    %787 = vrot.lane.b32.xlu0 %v772, 104
    %v788 = vpop.permute.xlu0 %787
    %v789 = vadd.f32 %v786, %v788
    %v790 = vadd.f32 %v784, %v789
    %v791 = vmax.f32 %v790, 1e-08
    %v792 = vrcp.pop %v791
    %v793 = vmul.f32 %v772, %v792
    %794 = vrot.lane.b32.xlu0 %v793, 1
    %v795 = vpop.permute.xlu0 %794
    %796 = vrot.lane.b32.xlu0 %v793, 127
    %v797 = vpop.permute.xlu0 %796
    %v798 = vadd.f32 %v795, %v797
    %v799 = vadd.f32 %v793, %v798
    %800 = vrot.lane.b32.xlu0 %v793, 2
    %v801 = vpop.permute.xlu0 %800
    %802 = vrot.lane.b32.xlu0 %v793, 126
    %v803 = vpop.permute.xlu0 %802
    %v804 = vadd.f32 %v801, %v803
    %v805 = vadd.f32 %v799, %v804
    %806 = vrot.lane.b32.xlu0 %v793, 3
    %v807 = vpop.permute.xlu0 %806
    %808 = vrot.lane.b32.xlu0 %v793, 125
    %v809 = vpop.permute.xlu0 %808
    %v810 = vadd.f32 %v807, %v809
    %v811 = vadd.f32 %v805, %v810
    %v812 = vmax.f32 %v811, 1e-08
    %v813 = vrcp.pop %v812
    %v814 = vmul.f32 %v793, %v813
    %815 = vst [vmem:[#allocation7] sm:$0xff] %v814
    // Predicated region
    $region22: #{tpu_custom_call.1} parent=1 // pred_check
      _
    $region23: #{tpu_custom_call.1} parent=1 // pred_check_branch
      %817 = sbr.rel (0) target = $region25
    $region24: #{tpu_custom_call.1} parent=1 // pred_region
      %s819 = ssub.s32 128, 128
      %820 = vsyncadd [#allocation4], %s819
      %s822 = sshll.u32 [#allocation7], 4
      %s823 = int_to_ptr.vmem [resolvable:$true] %s822
      %825 = dma.vmem_to_hbm [thread:$0]  %s823, 128, %s3, [#allocation4]
    $region25: #{tpu_custom_call.1} parent=1 // pred_fallthru
      _
    // Predicated region
    $region26: #{tpu_custom_call.1} parent=1 // pred_check
      _
    $region27: #{tpu_custom_call.1} parent=1 // pred_check_branch
      %827 = sbr.rel (0) target = $region29
    $region28: #{tpu_custom_call.1} parent=1 // pred_region
      %828 = dma.done [#allocation4], 128
    $region29: #{tpu_custom_call.1} parent=1 // pred_fallthru
      _
    %829 = vsyncpa [#allocation3], 1
    %830 = vsyncpa [#allocation6], 1
    %831 = vsyncpa [#allocation4], 1

</llo_original>
